<compile_context>
chip_gen: v7x
topology: tpu7x:2x2x1
jax: 0.10.0
libtpu: 0.0.40
codegen_flags: <defaults>
</compile_context>

<pallas_src>
import jax
import jax.numpy as jnp
from jax.experimental import pallas as pl
from jax.experimental.pallas import tpu as pltpu


def _custom_loss_kernel(steps_ref, tgt_ref, x_ref, out_ref):
    # steps_ref : (2,)      f32   SMEM   [stepsize_sim, stepsize_con]
    # tgt_ref   : (H, W)    int32 VMEM   labels for this batch element
    # x_ref     : (C, H, W) logits (native dtype) for this batch element (NCHW)
    # out_ref   : (B, 1)    f32   SMEM   resident output; this step writes row b
    b = pl.program_id(0)
    C, H, W = x_ref.shape
    tgt = tgt_ref[...]

    # Cache channel planes in vregs when they comfortably fit (static decision);
    # otherwise re-load each plane from VMEM per pass (vld slots are not the
    # bottleneck here — the fused pass is VALU/EUP-bound).
    per_plane_vregs = (-(-H // 8)) * (-(-W // 128))
    if C * per_plane_vregs <= 16:
        _planes = [x_ref[c].astype(jnp.float32) for c in range(C)]
        plane = lambda c: _planes[c]
    else:
        plane = lambda c: x_ref[c].astype(jnp.float32)

    # ---- pass 1: running max over channel planes (full-width VPU, lanes = W) ----
    m = plane(0)
    for c in range(1, C):
        m = jnp.maximum(m, plane(c))

    # ---- pass 2: fused exp-sum / label-pick / total-variation accumulation ----
    exp_sum = jnp.zeros((H, W), jnp.float32)
    picked = jnp.zeros((H, W), jnp.float32)
    hpy_acc = jnp.zeros((H - 1, W), jnp.float32)   # diff along H (sublane slice)
    hpz_acc = jnp.zeros((H, W - 1), jnp.float32)   # diff along W (lane slice)
    for c in range(C):
        xc = plane(c)
        exp_sum = exp_sum + jnp.exp(xc - m)
        picked = picked + jnp.where(tgt == c, xc, 0.0)
        hpy_acc = hpy_acc + jnp.abs(xc[1:, :] - xc[:-1, :])
        hpz_acc = hpz_acc + jnp.abs(xc[:, 1:] - xc[:, :-1])

    lse = jnp.log(exp_sum) + m

    # Single cross-lane reduction per term; 1/size constants folded into one mul.
    ce = jnp.sum(lse - picked) * jnp.float32(1.0 / (H * W))
    tv = (jnp.sum(hpy_acc) * jnp.float32(1.0 / ((H - 1) * W * C))
          + jnp.sum(hpz_acc) * jnp.float32(1.0 / (H * (W - 1) * C)))

    out_ref[b, 0] = steps_ref[0] * ce + steps_ref[1] * tv


def custom_loss(output, target, stepsize_sim=1.0, stepsize_con=1.0):
    """output: (B, C, H, W) logits (any float dtype; PyTorch NCHW conv output).
       target: (B, H, W) or (B, H*W) integer class labels in [0, C)."""
    B, C, H, W = output.shape
    tgt = jnp.reshape(target, (B, H, W)).astype(jnp.int32)
    steps = jnp.array([stepsize_sim, stepsize_con], dtype=jnp.float32)

    # VMEM budget: double-buffered logits + label blocks, with headroom.
    itemsize = jnp.dtype(output.dtype).itemsize
    vmem_needed = 2 * (C * H * W * itemsize + H * W * 4) + (2 << 20)
    vmem_limit = int(min(max(32 << 20, vmem_needed), 48 << 20))

    per_batch = pl.pallas_call(
        _custom_loss_kernel,
        out_shape=jax.ShapeDtypeStruct((B, 1), jnp.float32),
        grid=(B,),
        in_specs=[
            # Traced loss weights: whole (2,) array in SMEM.
            pl.BlockSpec(memory_space=pltpu.MemorySpace.SMEM),
            # Labels: one (H, W) plane per batch element.
            pl.BlockSpec((pl.Squeezed(), H, W), lambda b: (b, 0, 0)),
            # Logits: one (C, H, W) block per batch element, consumed as NCHW.
            pl.BlockSpec((pl.Squeezed(), C, H, W), lambda b: (b, 0, 0, 0)),
        ],
        # Whole (B, 1) output resident in SMEM across the batch grid axis;
        # each step writes its own row (requires "arbitrary" semantics).
        out_specs=pl.BlockSpec((B, 1), lambda b: (0, 0),
                               memory_space=pltpu.MemorySpace.SMEM),
        compiler_params=pltpu.CompilerParams(
            dimension_semantics=("arbitrary",),
            vmem_limit_bytes=vmem_limit),
    )(steps, tgt, output)

    return jnp.mean(per_batch[:, 0])


def custom_loss_ref(output, target, stepsize_sim, stepsize_con):
    """Pure-JAX reference mirroring the PyTorch forward."""
    B, C, H, W = output.shape
    x = jnp.transpose(output, (0, 2, 3, 1)).astype(jnp.float32)
    tgt = jnp.reshape(target, (B, H * W)).astype(jnp.int32)
    total = jnp.float32(0.0)
    for i in range(B):
        logits = x[i].reshape(H * W, C)
        lse = jax.scipy.special.logsumexp(logits, axis=-1)
        picked = jnp.take_along_axis(logits, tgt[i][:, None], axis=-1)[:, 0]
        ce = jnp.mean(lse - picked)
        hpy = x[i][1:, :, :] - x[i][:-1, :, :]
        hpz = x[i][:, 1:, :] - x[i][:, :-1, :]
        tv = (jnp.sum(jnp.abs(hpy)) / hpy.size
              + jnp.sum(jnp.abs(hpz)) / hpz.size)
        total = total + stepsize_sim * ce + stepsize_con * tv
    return total / B


if __name__ == "__main__":
    key = jax.random.PRNGKey(0)
    B, C, H, W = 2, 4, 16, 16
    stepsize_sim, stepsize_con = 1.0, 5.0   # deterministic "params" from __init__

    k1, k2 = jax.random.split(key)
    output = jax.random.normal(k1, (B, C, H, W), dtype=jnp.float32)
    target = jax.random.randint(k2, (B, H, W), 0, C, dtype=jnp.int32)

    loss = jax.block_until_ready(
        custom_loss(output, target, stepsize_sim, stepsize_con))

    ref = custom_loss_ref(output, target, stepsize_sim, stepsize_con)
    assert jnp.allclose(loss, ref, rtol=1e-4, atol=1e-4), (loss, ref)

    print("KERNEL_OK")
</pallas_src>

<mosaic_0001>
module attributes {stable_mosaic.version = 11 : i64} {
  func.func @_custom_loss_kernel(%arg0: i32, %arg1: memref<2xf32, #tpu.memory_space<smem>>, %arg2: memref<1x16x16xi32, #tpu.memory_space<vmem>>, %arg3: memref<1x4x16x16xf32, #tpu.memory_space<vmem>>, %arg4: memref<2x1xf32, #tpu.memory_space<smem>>) attributes {dimension_semantics = [#tpu.dimension_semantics<arbitrary>], iteration_bounds = array<i64: 2>, scalar_prefetch = 0 : i64, scratch_operands = 0 : i64, tpu.core_type = #tpu.core_type<tc>, window_params = [{transform_indices = @transform_0, window_bounds = array<i64: 2>}, {transform_indices = @transform_1, window_bounds = array<i64: 1, 16, 16>}, {transform_indices = @transform_2, window_bounds = array<i64: 1, 4, 16, 16>}, {transform_indices = @transform_3, window_bounds = array<i64: 2, 1>}]} {
    %c0 = arith.constant 0 : index
    %c0_0 = arith.constant 0 : index
    %c0_1 = arith.constant 0 : index
    %0 = vector.load %arg2[%c0, %c0_0, %c0_1] : memref<1x16x16xi32, #tpu.memory_space<vmem>>, vector<1x16x16xi32>
    %1 = vector.shape_cast %0 : vector<1x16x16xi32> to vector<16x16xi32>
    %c0_2 = arith.constant 0 : index
    %c0_3 = arith.constant 0 : index
    %c0_4 = arith.constant 0 : index
    %c0_5 = arith.constant 0 : index
    %2 = vector.load %arg3[%c0_2, %c0_3, %c0_4, %c0_5] : memref<1x4x16x16xf32, #tpu.memory_space<vmem>>, vector<1x1x16x16xf32>
    %3 = vector.shape_cast %2 : vector<1x1x16x16xf32> to vector<16x16xf32>
    %c0_6 = arith.constant 0 : index
    %c1 = arith.constant 1 : index
    %c0_7 = arith.constant 0 : index
    %c0_8 = arith.constant 0 : index
    %4 = vector.load %arg3[%c0_6, %c1, %c0_7, %c0_8] : memref<1x4x16x16xf32, #tpu.memory_space<vmem>>, vector<1x1x16x16xf32>
    %5 = vector.shape_cast %4 : vector<1x1x16x16xf32> to vector<16x16xf32>
    %c0_9 = arith.constant 0 : index
    %c2 = arith.constant 2 : index
    %c0_10 = arith.constant 0 : index
    %c0_11 = arith.constant 0 : index
    %6 = vector.load %arg3[%c0_9, %c2, %c0_10, %c0_11] : memref<1x4x16x16xf32, #tpu.memory_space<vmem>>, vector<1x1x16x16xf32>
    %7 = vector.shape_cast %6 : vector<1x1x16x16xf32> to vector<16x16xf32>
    %c0_12 = arith.constant 0 : index
    %c3 = arith.constant 3 : index
    %c0_13 = arith.constant 0 : index
    %c0_14 = arith.constant 0 : index
    %8 = vector.load %arg3[%c0_12, %c3, %c0_13, %c0_14] : memref<1x4x16x16xf32, #tpu.memory_space<vmem>>, vector<1x1x16x16xf32>
    %9 = vector.shape_cast %8 : vector<1x1x16x16xf32> to vector<16x16xf32>
    %10 = arith.maximumf %3, %5 : vector<16x16xf32>
    %11 = arith.maximumf %10, %7 : vector<16x16xf32>
    %12 = arith.maximumf %11, %9 : vector<16x16xf32>
    %cst = arith.constant 0.000000e+00 : f32
    %13 = vector.broadcast %cst : f32 to vector<16x16xf32>
    %cst_15 = arith.constant 0.000000e+00 : f32
    %14 = vector.broadcast %cst_15 : f32 to vector<16x16xf32>
    %cst_16 = arith.constant 0.000000e+00 : f32
    %15 = vector.broadcast %cst_16 : f32 to vector<15x16xf32>
    %cst_17 = arith.constant 0.000000e+00 : f32
    %16 = vector.broadcast %cst_17 : f32 to vector<16x15xf32>
    %17 = arith.subf %3, %12 : vector<16x16xf32>
    %18 = math.exp %17 : vector<16x16xf32>
    %19 = arith.addf %13, %18 : vector<16x16xf32>
    %c0_i32 = arith.constant 0 : i32
    %20 = vector.broadcast %c0_i32 : i32 to vector<16x16xi32>
    %21 = arith.cmpi eq, %1, %20 : vector<16x16xi32>
    %cst_18 = arith.constant 0.000000e+00 : f32
    %22 = vector.broadcast %cst_18 : f32 to vector<16x16xf32>
    %23 = arith.select %21, %3, %22 : vector<16x16xi1>, vector<16x16xf32>
    %24 = arith.addf %14, %23 : vector<16x16xf32>
    %25 = vector.extract_strided_slice %3 {offsets = [1, 0], sizes = [15, 16], strides = [1, 1]} : vector<16x16xf32> to vector<15x16xf32>
    %26 = vector.extract_strided_slice %3 {offsets = [0, 0], sizes = [15, 16], strides = [1, 1]} : vector<16x16xf32> to vector<15x16xf32>
    %27 = arith.subf %25, %26 : vector<15x16xf32>
    %28 = math.absf %27 : vector<15x16xf32>
    %29 = arith.addf %15, %28 : vector<15x16xf32>
    %30 = vector.extract_strided_slice %3 {offsets = [0, 1], sizes = [16, 15], strides = [1, 1]} : vector<16x16xf32> to vector<16x15xf32>
    %31 = vector.extract_strided_slice %3 {offsets = [0, 0], sizes = [16, 15], strides = [1, 1]} : vector<16x16xf32> to vector<16x15xf32>
    %32 = arith.subf %30, %31 : vector<16x15xf32>
    %33 = math.absf %32 : vector<16x15xf32>
    %34 = arith.addf %16, %33 : vector<16x15xf32>
    %35 = arith.subf %5, %12 : vector<16x16xf32>
    %36 = math.exp %35 : vector<16x16xf32>
    %37 = arith.addf %19, %36 : vector<16x16xf32>
    %c1_i32 = arith.constant 1 : i32
    %38 = vector.broadcast %c1_i32 : i32 to vector<16x16xi32>
    %39 = arith.cmpi eq, %1, %38 : vector<16x16xi32>
    %cst_19 = arith.constant 0.000000e+00 : f32
    %40 = vector.broadcast %cst_19 : f32 to vector<16x16xf32>
    %41 = arith.select %39, %5, %40 : vector<16x16xi1>, vector<16x16xf32>
    %42 = arith.addf %24, %41 : vector<16x16xf32>
    %43 = vector.extract_strided_slice %5 {offsets = [1, 0], sizes = [15, 16], strides = [1, 1]} : vector<16x16xf32> to vector<15x16xf32>
    %44 = vector.extract_strided_slice %5 {offsets = [0, 0], sizes = [15, 16], strides = [1, 1]} : vector<16x16xf32> to vector<15x16xf32>
    %45 = arith.subf %43, %44 : vector<15x16xf32>
    %46 = math.absf %45 : vector<15x16xf32>
    %47 = arith.addf %29, %46 : vector<15x16xf32>
    %48 = vector.extract_strided_slice %5 {offsets = [0, 1], sizes = [16, 15], strides = [1, 1]} : vector<16x16xf32> to vector<16x15xf32>
    %49 = vector.extract_strided_slice %5 {offsets = [0, 0], sizes = [16, 15], strides = [1, 1]} : vector<16x16xf32> to vector<16x15xf32>
    %50 = arith.subf %48, %49 : vector<16x15xf32>
    %51 = math.absf %50 : vector<16x15xf32>
    %52 = arith.addf %34, %51 : vector<16x15xf32>
    %53 = arith.subf %7, %12 : vector<16x16xf32>
    %54 = math.exp %53 : vector<16x16xf32>
    %55 = arith.addf %37, %54 : vector<16x16xf32>
    %c2_i32 = arith.constant 2 : i32
    %56 = vector.broadcast %c2_i32 : i32 to vector<16x16xi32>
    %57 = arith.cmpi eq, %1, %56 : vector<16x16xi32>
    %cst_20 = arith.constant 0.000000e+00 : f32
    %58 = vector.broadcast %cst_20 : f32 to vector<16x16xf32>
    %59 = arith.select %57, %7, %58 : vector<16x16xi1>, vector<16x16xf32>
    %60 = arith.addf %42, %59 : vector<16x16xf32>
    %61 = vector.extract_strided_slice %7 {offsets = [1, 0], sizes = [15, 16], strides = [1, 1]} : vector<16x16xf32> to vector<15x16xf32>
    %62 = vector.extract_strided_slice %7 {offsets = [0, 0], sizes = [15, 16], strides = [1, 1]} : vector<16x16xf32> to vector<15x16xf32>
    %63 = arith.subf %61, %62 : vector<15x16xf32>
    %64 = math.absf %63 : vector<15x16xf32>
    %65 = arith.addf %47, %64 : vector<15x16xf32>
    %66 = vector.extract_strided_slice %7 {offsets = [0, 1], sizes = [16, 15], strides = [1, 1]} : vector<16x16xf32> to vector<16x15xf32>
    %67 = vector.extract_strided_slice %7 {offsets = [0, 0], sizes = [16, 15], strides = [1, 1]} : vector<16x16xf32> to vector<16x15xf32>
    %68 = arith.subf %66, %67 : vector<16x15xf32>
    %69 = math.absf %68 : vector<16x15xf32>
    %70 = arith.addf %52, %69 : vector<16x15xf32>
    %71 = arith.subf %9, %12 : vector<16x16xf32>
    %72 = math.exp %71 : vector<16x16xf32>
    %73 = arith.addf %55, %72 : vector<16x16xf32>
    %c3_i32 = arith.constant 3 : i32
    %74 = vector.broadcast %c3_i32 : i32 to vector<16x16xi32>
    %75 = arith.cmpi eq, %1, %74 : vector<16x16xi32>
    %cst_21 = arith.constant 0.000000e+00 : f32
    %76 = vector.broadcast %cst_21 : f32 to vector<16x16xf32>
    %77 = arith.select %75, %9, %76 : vector<16x16xi1>, vector<16x16xf32>
    %78 = arith.addf %60, %77 : vector<16x16xf32>
    %79 = vector.extract_strided_slice %9 {offsets = [1, 0], sizes = [15, 16], strides = [1, 1]} : vector<16x16xf32> to vector<15x16xf32>
    %80 = vector.extract_strided_slice %9 {offsets = [0, 0], sizes = [15, 16], strides = [1, 1]} : vector<16x16xf32> to vector<15x16xf32>
    %81 = arith.subf %79, %80 : vector<15x16xf32>
    %82 = math.absf %81 : vector<15x16xf32>
    %83 = arith.addf %65, %82 : vector<15x16xf32>
    %84 = vector.extract_strided_slice %9 {offsets = [0, 1], sizes = [16, 15], strides = [1, 1]} : vector<16x16xf32> to vector<16x15xf32>
    %85 = vector.extract_strided_slice %9 {offsets = [0, 0], sizes = [16, 15], strides = [1, 1]} : vector<16x16xf32> to vector<16x15xf32>
    %86 = arith.subf %84, %85 : vector<16x15xf32>
    %87 = math.absf %86 : vector<16x15xf32>
    %88 = arith.addf %70, %87 : vector<16x15xf32>
    %89 = math.log %73 : vector<16x16xf32>
    %90 = arith.addf %89, %12 : vector<16x16xf32>
    %91 = arith.subf %90, %78 : vector<16x16xf32>
    %92 = vector.shape_cast %91 : vector<16x16xf32> to vector<1x16x16xf32>
    %cst_22 = arith.constant dense<0.000000e+00> : vector<1xf32>
    %93 = vector.multi_reduction <add>, %92, %cst_22 [1, 2] : vector<1x16x16xf32> to vector<1xf32>
    %94 = vector.shape_cast %93 : vector<1xf32> to vector<1x1x1xf32>
    %95 = vector.extract %94[0, 0, 0] : f32 from vector<1x1x1xf32>
    %cst_23 = arith.constant 3.906250e-03 : f32
    %96 = arith.mulf %95, %cst_23 : f32
    %97 = vector.shape_cast %83 : vector<15x16xf32> to vector<1x15x16xf32>
    %cst_24 = arith.constant dense<0.000000e+00> : vector<1xf32>
    %98 = vector.multi_reduction <add>, %97, %cst_24 [1, 2] : vector<1x15x16xf32> to vector<1xf32>
    %99 = vector.shape_cast %98 : vector<1xf32> to vector<1x1x1xf32>
    %100 = vector.extract %99[0, 0, 0] : f32 from vector<1x1x1xf32>
    %cst_25 = arith.constant 0.00104166672 : f32
    %101 = arith.mulf %100, %cst_25 : f32
    %102 = vector.shape_cast %88 : vector<16x15xf32> to vector<1x16x15xf32>
    %cst_26 = arith.constant dense<0.000000e+00> : vector<1xf32>
    %103 = vector.multi_reduction <add>, %102, %cst_26 [1, 2] : vector<1x16x15xf32> to vector<1xf32>
    %104 = vector.shape_cast %103 : vector<1xf32> to vector<1x1x1xf32>
    %105 = vector.extract %104[0, 0, 0] : f32 from vector<1x1x1xf32>
    %cst_27 = arith.constant 0.00104166672 : f32
    %106 = arith.mulf %105, %cst_27 : f32
    %107 = arith.addf %101, %106 : f32
    %c0_28 = arith.constant 0 : index
    %108 = memref.load %arg1[%c0_28] : memref<2xf32, #tpu.memory_space<smem>>
    %109 = arith.mulf %108, %96 : f32
    %c1_29 = arith.constant 1 : index
    %110 = memref.load %arg1[%c1_29] : memref<2xf32, #tpu.memory_space<smem>>
    %111 = arith.mulf %110, %107 : f32
    %112 = arith.addf %109, %111 : f32
    %113 = arith.index_cast %arg0 : i32 to index
    %c0_30 = arith.constant 0 : index
    %114 = memref.load %arg4[%113, %c0_30] : memref<2x1xf32, #tpu.memory_space<smem>>
    memref.store %112, %arg4[%113, %c0_30] : memref<2x1xf32, #tpu.memory_space<smem>>
    return
  }
  func.func @transform_0(%arg0: i32) -> i32 {
    %c0_i32 = arith.constant 0 : i32
    %c0_i32_0 = arith.constant 0 : i32
    return %c0_i32 : i32
  }
  func.func @transform_1(%arg0: i32) -> (i32, i32, i32) {
    %c0_i32 = arith.constant 0 : i32
    %c0_i32_0 = arith.constant 0 : i32
    %c0_i32_1 = arith.constant 0 : i32
    return %arg0, %c0_i32, %c0_i32_0 : i32, i32, i32
  }
  func.func @transform_2(%arg0: i32) -> (i32, i32, i32, i32) {
    %c0_i32 = arith.constant 0 : i32
    %c0_i32_0 = arith.constant 0 : i32
    %c0_i32_1 = arith.constant 0 : i32
    %c0_i32_2 = arith.constant 0 : i32
    return %arg0, %c0_i32, %c0_i32_0, %c0_i32_1 : i32, i32, i32, i32
  }
  func.func @transform_3(%arg0: i32) -> (i32, i32) {
    %c0_i32 = arith.constant 0 : i32
    %c0_i32_0 = arith.constant 0 : i32
    %c0_i32_1 = arith.constant 0 : i32
    return %c0_i32, %c0_i32_0 : i32, i32
  }
}

</mosaic_0001>

<llo_original>
// kernel: tpu_custom_call.1
$region0: #{tpu_custom_call.1}
  #allocation0 [shape = 'u32[]', space=smem, size = 0x4, offset = 0x4, fixed_abs, tag = 'smem constant byte address 0x4 - core index']
  #allocation1 [shape = 'u32[144,128]{1,0:T(1,128)}', space=vmem, size = 0x12000, scoped, tag = 'internal scratch']
  %s0 = inlined_call_operand.hbm [shape: f32[2], index: 0, kind: input, shape index: {}]
  %s1 = inlined_call_operand.hbm [shape: s32[2,16,16], index: 1, kind: input, shape index: {}]
  %s2 = inlined_call_operand.hbm [shape: f32[2,4,16,16], index: 2, kind: input, shape index: {}]
  %s3 = inlined_call_operand.vmem [shape: f32[2,1], index: 3, kind: output, shape index: {}]
  %s4 = sld [smem:[#allocation0]]
  $region57: #{tpu_custom_call.1} parent=0
    _
  %s6 = ssub.s32 1, %s4
  %s7 = scalar_select 0, %s6, %s4
  $region1: #{tpu_custom_call.1} parent=0
    #allocation2 [shape = 'u8[512]{0}', space=smem, size = 0x200, scoped, tag = 'input window, operand 0, single buffered']
    #allocation3 [shape = 's32[2]{0}', space=sflag, size = 0x8, scoped, tag = 'scoped memory for tpu_custom_call.1']
    #allocation4 [shape = 's32[2]{0}', space=sflag, size = 0x8, scoped, tag = 'scoped memory for tpu_custom_call.1']
    #allocation5 [shape = 's32[2]{0}', space=sflag, size = 0x8, scoped, tag = 'scoped memory for tpu_custom_call.1']
    #allocation6 [shape = 'u8[16384]{0}', space=vmem, size = 0x4000, scoped, tag = 'input window, operand 1']
    #allocation7 [shape = 'u8[65536]{0}', space=vmem, size = 0x10000, scoped, tag = 'input window, operand 2']
    #allocation8 [shape = 's32[2]{0}', space=sflag, size = 0x8, scoped, tag = 'scoped memory for tpu_custom_call.1']
    #allocation9 [shape = 'u8[1024]{0}', space=smem, size = 0x400, scoped, tag = 'output window, operand 0, single buffered']
    %8 = vsyncpa [#allocation4], 0
    %9 = vsyncpa [#allocation3], 0
    %s10 = scalar_lea.sflag [#allocation3], 1
    %11 = vsyncpa %s10, 0
    %12 = vsyncpa [#allocation8], 0
    %s13 = scalar_lea.sflag [#allocation8], 1
    %14 = vsyncpa %s13, 0
    %15 = vsyncpa [#allocation5], 0
    loop: start=0, step=1, limit=4
    $region2: #{tpu_custom_call.1} parent=1 // loop_pre_header
      _
    $region3: #{tpu_custom_call.1} parent=1 // loop_header
      %s17 = sphi 0, %s21
      %p18 = scmp.ge.s32.totalorder %s17, 4
      %s25 = sphi 0, %s25
      %s27 = sphi 0, %s25
      %s28 = sphi 0, %s27
      %s42 = sphi 0, %s28
      %s48 = sphi 0, %s50
      %s51 = sphi 0, %s48
      %s52 = sphi 0, %s51
      %s68 = sphi 0, %s52
      %s74 = sphi 0, %s76
      %s77 = sphi 0, %s74
      %s78 = sphi 0, %s77
      %s94 = sphi 0, %s78
      %s98 = sphi 0, %s98
      %s100 = sphi 0, %s98
      %s101 = sphi 0, %s100
      %s115 = sphi 0, %s101
    $region4: #{tpu_custom_call.1} parent=1 // loop_header_branch
      %20 = sbr.rel (%p18) target = $region8
    $region5: #{tpu_custom_call.1} parent=1 // loop_body
      %s22 = ssub.s32 %s17, 1
      %s23 = ssub.s32 %s17, 2
      %s24 = sadd.s32 %s17, 1
      %s26 = sadd.s32 %s25, 1
      %p29 = scmp.eq.s32.totalorder %s17, 1
      %p30 = scmp.ne.s32.totalorder %s25, %s27
      %p31 = scmp.eq.s32.totalorder %s17, 0
      %p32 = por %p30, %p31
      %p33 = scmp.ne.s32.totalorder %s25, %s27
      %p34 = scmp.eq.s32.totalorder %s22, 1
      %p35 = por %p33, %p34
      %p36 = scmp.ne.s32.totalorder %s27, %s28
      %p37 = scmp.eq.s32.totalorder %s22, 0
      %p38 = por %p36, %p37
      %p39 = scmp.ne.s32.totalorder %s27, %s28
      %p40 = scmp.eq.s32.totalorder %s23, 1
      %p41 = por %p39, %p40
      %p43 = scmp.ne.s32.totalorder %s28, %s42
      %p44 = scmp.eq.s32.totalorder %s23, 0
      %p45 = por %p43, %p44
      %s46 = ssub.s32 %s17, %s24
      %p47 = scmp.eq.s32.totalorder %s46, 0
      %s49 = sadd.s32 %s48, 1
      %s50 = scalar_select %p47, %s48, %s49
      %p53 = pneg %p47
      %p54 = scmp.eq.s32.totalorder %s17, 1
      %p55 = por %p53, %p54
      %p56 = scmp.ne.s32.totalorder %s48, %s51
      %p57 = scmp.eq.s32.totalorder %s17, 0
      %p58 = por %p56, %p57
      %p59 = scmp.ne.s32.totalorder %s48, %s51
      %p60 = scmp.eq.s32.totalorder %s22, 1
      %p61 = por %p59, %p60
      %p62 = scmp.ne.s32.totalorder %s51, %s52
      %p63 = scmp.eq.s32.totalorder %s22, 0
      %p64 = por %p62, %p63
      %p65 = scmp.ne.s32.totalorder %s51, %s52
      %p66 = scmp.eq.s32.totalorder %s23, 1
      %p67 = por %p65, %p66
      %p69 = scmp.ne.s32.totalorder %s52, %s68
      %p70 = scmp.eq.s32.totalorder %s23, 0
      %p71 = por %p69, %p70
      %s72 = ssub.s32 %s17, %s24
      %p73 = scmp.eq.s32.totalorder %s72, 0
      %s75 = sadd.s32 %s74, 1
      %s76 = scalar_select %p73, %s74, %s75
      %p79 = pneg %p73
      %p80 = scmp.eq.s32.totalorder %s17, 1
      %p81 = por %p79, %p80
      %p82 = scmp.ne.s32.totalorder %s74, %s77
      %p83 = scmp.eq.s32.totalorder %s17, 0
      %p84 = por %p82, %p83
      %p85 = scmp.ne.s32.totalorder %s74, %s77
      %p86 = scmp.eq.s32.totalorder %s22, 1
      %p87 = por %p85, %p86
      %p88 = scmp.ne.s32.totalorder %s77, %s78
      %p89 = scmp.eq.s32.totalorder %s22, 0
      %p90 = por %p88, %p89
      %p91 = scmp.ne.s32.totalorder %s77, %s78
      %p92 = scmp.eq.s32.totalorder %s23, 1
      %p93 = por %p91, %p92
      %p95 = scmp.ne.s32.totalorder %s78, %s94
      %p96 = scmp.eq.s32.totalorder %s23, 0
      %p97 = por %p95, %p96
      %s99 = sadd.s32 %s98, 1
      %p102 = scmp.eq.s32.totalorder %s17, 1
      %p103 = scmp.ne.s32.totalorder %s98, %s100
      %p104 = scmp.eq.s32.totalorder %s17, 0
      %p105 = por %p103, %p104
      %p106 = scmp.ne.s32.totalorder %s98, %s100
      %p107 = scmp.eq.s32.totalorder %s22, 1
      %p108 = por %p106, %p107
      %p109 = scmp.ne.s32.totalorder %s100, %s101
      %p110 = scmp.eq.s32.totalorder %s22, 0
      %p111 = por %p109, %p110
      %p112 = scmp.ne.s32.totalorder %s100, %s101
      %p113 = scmp.eq.s32.totalorder %s23, 1
      %p114 = por %p112, %p113
      %p116 = scmp.ne.s32.totalorder %s101, %s115
      %p117 = scmp.eq.s32.totalorder %s23, 0
      %p118 = por %p116, %p117
      %p119 = scmp.le.s32.totalorder 1, %s17
      %p120 = scmp.lt.s32.totalorder %s17, 3
      %p121 = pnand %p119, %p120
      %p122 = pneg %p121
      // Predicated region
      $region9: #{tpu_custom_call.1} parent=5 // pred_check
        _
      $region10: #{tpu_custom_call.1} parent=5 // pred_check_branch
        %124 = sbr.rel (%p121) target = $region12
      $region11: #{tpu_custom_call.1} parent=5 // pred_region
        %s125 = ssub.s32 %s17, 1
        // Predicated region
        $region13: #{tpu_custom_call.1} parent=11 // pred_check
          %p126 = pneg %p38
        $region14: #{tpu_custom_call.1} parent=11 // pred_check_branch
          %128 = sbr.rel (%p126) target = $region16
        $region15: #{tpu_custom_call.1} parent=11 // pred_region
          %s130 = ssub.s32 16, 16
          %131 = vsyncadd [#allocation4], %s130
          %134 = dma.hbm_to_smem %s0, 16, [#allocation2], [#allocation4]
        $region16: #{tpu_custom_call.1} parent=11 // pred_fallthru
          _
      $region12: #{tpu_custom_call.1} parent=5 // pred_fallthru
        _
      %p135 = scmp.lt.s32.totalorder %s17, 2
      // Predicated region
      $region17: #{tpu_custom_call.1} parent=5 // pred_check
        %p136 = pneg %p135
      $region18: #{tpu_custom_call.1} parent=5 // pred_check_branch
        %138 = sbr.rel (%p136) target = $region20
      $region19: #{tpu_custom_call.1} parent=5 // pred_region
        // Predicated region
        $region21: #{tpu_custom_call.1} parent=19 // pred_check
          %p139 = pneg %p58
        $region22: #{tpu_custom_call.1} parent=19 // pred_check_branch
          %141 = sbr.rel (%p139) target = $region24
        $region23: #{tpu_custom_call.1} parent=19 // pred_region
          %s142 = sand.u32 %s48, 1
          %s143 = scalar_lea.sflag [#allocation3], %s142
          %s144 = sand.u32 %s48, 1
          %s145 = smul.addr %s144, 16
          %s146 = scalar_lea.vmem [#allocation6], %s145
          %s148 = ssub.s32 256, 256
          %149 = vsyncadd %s143, %s148
          %s150 = smul.addr %s17, 2
          %s151 = smul.addr %s150, 128
          %s152 = scalar_lea.hbm %s1, %s151
          %s153 = sshll.u32 %s146, 4
          %s154 = int_to_ptr.vmem [resolvable:$true] %s153
          %159 = dma.hbm_to_vmem [thread:$0]  %s152, 256, %s154, %s143, 128, 128, 8
        $region24: #{tpu_custom_call.1} parent=19 // pred_fallthru
          _
        // Predicated region
        $region25: #{tpu_custom_call.1} parent=19 // pred_check
          %p160 = pneg %p84
        $region26: #{tpu_custom_call.1} parent=19 // pred_check_branch
          %162 = sbr.rel (%p160) target = $region28
        $region27: #{tpu_custom_call.1} parent=19 // pred_region
          %s163 = sand.u32 %s74, 1
          %s164 = scalar_lea.sflag [#allocation8], %s163
          %s165 = sand.u32 %s74, 1
          %s166 = smul.addr %s165, 64
          %s167 = scalar_lea.vmem [#allocation7], %s166
          %s169 = ssub.s32 1024, 1024
          %170 = vsyncadd %s164, %s169
          %s171 = smul.addr %s17, 8
          %s172 = smul.addr %s171, 128
          %s173 = scalar_lea.hbm %s2, %s172
          %s174 = sshll.u32 %s167, 4
          %s175 = int_to_ptr.vmem [resolvable:$true] %s174
          %180 = dma.hbm_to_vmem [thread:$0]  %s173, 1024, %s175, %s164, 128, 128, 8
        $region28: #{tpu_custom_call.1} parent=19 // pred_fallthru
          _
      $region20: #{tpu_custom_call.1} parent=5 // pred_fallthru
        _
      %p181 = scmp.le.s32.totalorder 1, %s17
      %p182 = scmp.lt.s32.totalorder %s17, 3
      %p183 = pnand %p181, %p182
      %p184 = pneg %p183
      // Predicated region
      $region29: #{tpu_custom_call.1} parent=5 // pred_check
        _
      $region30: #{tpu_custom_call.1} parent=5 // pred_check_branch
        %186 = sbr.rel (%p183) target = $region32
      $region31: #{tpu_custom_call.1} parent=5 // pred_region
        %s187 = ssub.s32 %s17, 1
        // Predicated region
        $region33: #{tpu_custom_call.1} parent=31 // pred_check
          %p188 = pneg %p38
        $region34: #{tpu_custom_call.1} parent=31 // pred_check_branch
          %190 = sbr.rel (%p188) target = $region36
        $region35: #{tpu_custom_call.1} parent=31 // pred_region
          %191 = dma.done [#allocation4], 16
        $region36: #{tpu_custom_call.1} parent=31 // pred_fallthru
          _
        %s192 = sand.u32 %s51, 1
        %s193 = scalar_lea.sflag [#allocation3], %s192
        %s194 = sand.u32 %s51, 1
        %s195 = smul.addr %s194, 16
        %s196 = scalar_lea.vmem [#allocation6], %s195
        // Predicated region
        $region37: #{tpu_custom_call.1} parent=31 // pred_check
          %p197 = pneg %p64
        $region38: #{tpu_custom_call.1} parent=31 // pred_check_branch
          %199 = sbr.rel (%p197) target = $region40
        $region39: #{tpu_custom_call.1} parent=31 // pred_region
          %200 = dma.done %s193, 256
        $region40: #{tpu_custom_call.1} parent=31 // pred_fallthru
          _
        %s201 = sand.u32 %s77, 1
        %s202 = scalar_lea.sflag [#allocation8], %s201
        %s203 = sand.u32 %s77, 1
        %s204 = smul.addr %s203, 64
        %s205 = scalar_lea.vmem [#allocation7], %s204
        // Predicated region
        $region41: #{tpu_custom_call.1} parent=31 // pred_check
          %p206 = pneg %p90
        $region42: #{tpu_custom_call.1} parent=31 // pred_check_branch
          %208 = sbr.rel (%p206) target = $region44
        $region43: #{tpu_custom_call.1} parent=31 // pred_region
          %209 = dma.done %s202, 1024
        $region44: #{tpu_custom_call.1} parent=31 // pred_fallthru
          _
        %210 = sfence
        %p211 = pneg %p38
        %p212 = pneg %p35
        %s213 = sand.u32 %s51, 1
        %s214 = scalar_lea.sflag [#allocation3], %s213
        %s215 = sand.u32 %s51, 1
        %s216 = smul.addr %s215, 16
        %s217 = scalar_lea.vmem [#allocation6], %s216
        %p218 = pneg %p64
        %p219 = pneg %p61
        %s220 = sand.u32 %s77, 1
        %s221 = scalar_lea.sflag [#allocation8], %s220
        %s222 = sand.u32 %s77, 1
        %s223 = smul.addr %s222, 64
        %s224 = scalar_lea.vmem [#allocation7], %s223
        %p225 = pneg %p90
        %p226 = pneg %p87
        %p227 = pneg %p111
        %p228 = pneg %p108
        %v229 = vld [vmem:[%s196] sm:$0xff]
        %v230 = vld [vmem:[%s196 + $0x8] sm:$0xff]
        %v231 = vld [vmem:[%s205] sm:$0xff]
        %v232 = vld [vmem:[%s205 + $0x8] sm:$0xff]
        %s233 = scalar_lea.vmem %s205, 16 [#allocation7]
        %v234 = vld [vmem:[%s233] sm:$0xff]
        %v235 = vld [vmem:[%s233 + $0x8] sm:$0xff]
        %s236 = scalar_lea.vmem %s205, 32 [#allocation7]
        %v237 = vld [vmem:[%s236] sm:$0xff]
        %v238 = vld [vmem:[%s236 + $0x8] sm:$0xff]
        %s239 = scalar_lea.vmem %s205, 48 [#allocation7]
        %v240 = vld [vmem:[%s239] sm:$0xff]
        %v241 = vld [vmem:[%s239 + $0x8] sm:$0xff]
        %v242 = vmax.f32 %v231, %v234
        %v243 = vmax.f32 %v232, %v235
        %v244 = vmax.f32 %v242, %v237
        %v245 = vmax.f32 %v243, %v238
        %v246 = vmax.f32 %v244, %v240
        %v247 = vmax.f32 %v245, %v241
        %v248 = vsub.f32 %v231, %v246
        %v249 = vsub.f32 %v232, %v247
        %v250 = vmul.f32 %v248, 1.442695
        %v251 = vpow.pop %v250
        %v252 = vmul.f32 %v249, 1.442695
        %v253 = vpow.pop %v252
        %v254 = vadd.f32 %v251, 0.0
        %v255 = vadd.f32 %v253, 0.0
        %vm256 = vcmp.eq.s32.totalorder %v229, 0
        %vm257 = vcmp.eq.s32.totalorder %v230, 0
        %v258 = vsel %vm256, %v231, 0.0
        %v259 = vsel %vm257, %v232, 0.0
        %v260 = vadd.f32 %v258, 0.0
        %v261 = vadd.f32 %v259, 0.0
        %vm264 = vcmask 1040384
        %v265 = vrot.slane %v231, 7
        %v266 = vrot.slane %v232, 7
        %v267 = vsel %vm264, %v265, %v266
        %v270 = vsub.f32 %v231, %v265
        %v271 = vsub.f32 %v232, %v267
        %v272 = vand.u32 2147483647, %v270
        %v273 = vand.u32 2147483647, %v271
        %v274 = vadd.f32 %v272, 0.0
        %v275 = vadd.f32 %v273, 0.0
        %276 = vrot.lane.b32.xlu0 %v231, 1
        %v277 = vpop.permute.xlu0 %276
        %278 = vrot.lane.b32.xlu0 %v232, 1
        %v279 = vpop.permute.xlu0 %278
        %v282 = vsub.f32 %v231, %v277
        %v283 = vsub.f32 %v232, %v279
        %v284 = vand.u32 2147483647, %v282
        %v285 = vand.u32 2147483647, %v283
        %v286 = vadd.f32 %v284, 0.0
        %v287 = vadd.f32 %v285, 0.0
        %v288 = vsub.f32 %v234, %v246
        %v289 = vsub.f32 %v235, %v247
        %v290 = vmul.f32 %v288, 1.442695
        %v291 = vpow.pop %v290
        %v292 = vmul.f32 %v289, 1.442695
        %v293 = vpow.pop %v292
        %v294 = vadd.f32 %v254, %v291
        %v295 = vadd.f32 %v255, %v293
        %vm296 = vcmp.eq.s32.totalorder %v229, 1
        %vm297 = vcmp.eq.s32.totalorder %v230, 1
        %v298 = vsel %vm296, %v234, 0.0
        %v299 = vsel %vm297, %v235, 0.0
        %v300 = vadd.f32 %v260, %v298
        %v301 = vadd.f32 %v261, %v299
        %v304 = vrot.slane %v234, 7
        %v305 = vrot.slane %v235, 7
        %v306 = vsel %vm264, %v304, %v305
        %v309 = vsub.f32 %v234, %v304
        %v310 = vsub.f32 %v235, %v306
        %v311 = vand.u32 2147483647, %v309
        %v312 = vand.u32 2147483647, %v310
        %v313 = vadd.f32 %v274, %v311
        %v314 = vadd.f32 %v275, %v312
        %315 = vrot.lane.b32.xlu0 %v234, 1
        %v316 = vpop.permute.xlu0 %315
        %317 = vrot.lane.b32.xlu0 %v235, 1
        %v318 = vpop.permute.xlu0 %317
        %v321 = vsub.f32 %v234, %v316
        %v322 = vsub.f32 %v235, %v318
        %v323 = vand.u32 2147483647, %v321
        %v324 = vand.u32 2147483647, %v322
        %v325 = vadd.f32 %v286, %v323
        %v326 = vadd.f32 %v287, %v324
        %v327 = vsub.f32 %v237, %v246
        %v328 = vsub.f32 %v238, %v247
        %v329 = vmul.f32 %v327, 1.442695
        %v330 = vpow.pop %v329
        %v331 = vmul.f32 %v328, 1.442695
        %v332 = vpow.pop %v331
        %v333 = vadd.f32 %v294, %v330
        %v334 = vadd.f32 %v295, %v332
        %vm335 = vcmp.eq.s32.totalorder %v229, 2
        %vm336 = vcmp.eq.s32.totalorder %v230, 2
        %v337 = vsel %vm335, %v237, 0.0
        %v338 = vsel %vm336, %v238, 0.0
        %v339 = vadd.f32 %v300, %v337
        %v340 = vadd.f32 %v301, %v338
        %v343 = vrot.slane %v237, 7
        %v344 = vrot.slane %v238, 7
        %v345 = vsel %vm264, %v343, %v344
        %v348 = vsub.f32 %v237, %v343
        %v349 = vsub.f32 %v238, %v345
        %v350 = vand.u32 2147483647, %v348
        %v351 = vand.u32 2147483647, %v349
        %v352 = vadd.f32 %v313, %v350
        %v353 = vadd.f32 %v314, %v351
        %354 = vrot.lane.b32.xlu0 %v237, 1
        %v355 = vpop.permute.xlu0 %354
        %356 = vrot.lane.b32.xlu0 %v238, 1
        %v357 = vpop.permute.xlu0 %356
        %v360 = vsub.f32 %v237, %v355
        %v361 = vsub.f32 %v238, %v357
        %v362 = vand.u32 2147483647, %v360
        %v363 = vand.u32 2147483647, %v361
        %v364 = vadd.f32 %v325, %v362
        %v365 = vadd.f32 %v326, %v363
        %v366 = vsub.f32 %v240, %v246
        %v367 = vsub.f32 %v241, %v247
        %v368 = vmul.f32 %v366, 1.442695
        %v369 = vpow.pop %v368
        %v370 = vmul.f32 %v367, 1.442695
        %v371 = vpow.pop %v370
        %v372 = vadd.f32 %v333, %v369
        %v373 = vadd.f32 %v334, %v371
        %vm374 = vcmp.eq.s32.totalorder %v229, 3
        %vm375 = vcmp.eq.s32.totalorder %v230, 3
        %v376 = vsel %vm374, %v240, 0.0
        %v377 = vsel %vm375, %v241, 0.0
        %v378 = vadd.f32 %v339, %v376
        %v379 = vadd.f32 %v340, %v377
        %v382 = vrot.slane %v240, 7
        %v383 = vrot.slane %v241, 7
        %v384 = vsel %vm264, %v382, %v383
        %v387 = vsub.f32 %v240, %v382
        %v388 = vsub.f32 %v241, %v384
        %v389 = vand.u32 2147483647, %v387
        %v390 = vand.u32 2147483647, %v388
        %v391 = vadd.f32 %v352, %v389
        %v392 = vadd.f32 %v353, %v390
        %393 = vrot.lane.b32.xlu0 %v240, 1
        %v394 = vpop.permute.xlu0 %393
        %395 = vrot.lane.b32.xlu0 %v241, 1
        %v396 = vpop.permute.xlu0 %395
        %v399 = vsub.f32 %v240, %v394
        %v400 = vsub.f32 %v241, %v396
        %v401 = vand.u32 2147483647, %v399
        %v402 = vand.u32 2147483647, %v400
        %v403 = vadd.f32 %v364, %v401
        %v404 = vadd.f32 %v365, %v402
        %v405 = vlog2.pop %v372
        %v406 = vmul.f32 %v405, 0.6931472
        %v407 = vlog2.pop %v373
        %v408 = vmul.f32 %v407, 0.6931472
        %v409 = vadd.f32 %v406, %v246
        %v410 = vadd.f32 %v408, %v247
        %v411 = vsub.f32 %v409, %v378
        %v412 = vsub.f32 %v410, %v379
        %vm413 = vcmask 130048
        %v414 = vsel %vm413, %v411, 0.0
        %v415 = vsel %vm413, %v412, 0.0
        %v416 = vadd.f32 %v414, %v415
        %417 = vadd.xlane.f32.xlu0 %v416
        %v418 = vpop.xlane.xlu0 %417
        %v419 = vrot.slane %v418, 4
        %v420 = vadd.f32 %v418, %v419
        %v421 = vrot.slane %v420, 2
        %v422 = vadd.f32 %v420, %v421
        %v423 = vrot.slane %v422, 1
        %v424 = vadd.f32 %v422, %v423
        %s425 = vtos %v424
        %s426 = smul.f32 %s425, 0.00390625
        %vm429 = vcmask 1046528
        %v430 = vrot.slane %v391, 1
        %v431 = vrot.slane %v392, 1
        %v432 = vsel %vm429, %v430, %v431
        %v435 = vsel %vm413, %v432, 0.0
        %vm436 = vcmask 129024
        %v437 = vsel %vm436, %v431, 0.0
        %v438 = vadd.f32 %v435, %v437
        %439 = vadd.xlane.f32.xlu0 %v438
        %v440 = vpop.xlane.xlu0 %439
        %v441 = vrot.slane %v440, 4
        %v442 = vadd.f32 %v440, %v441
        %v443 = vrot.slane %v442, 2
        %v444 = vadd.f32 %v442, %v443
        %v445 = vrot.slane %v444, 1
        %v446 = vadd.f32 %v444, %v445
        %s447 = vtos %v446
        %s448 = smul.f32 %s447, 0.0010416667
        %451 = vrot.lane.b32.xlu0 %v403, 127
        %v452 = vpop.permute.xlu0 %451
        %453 = vrot.lane.b32.xlu0 %v404, 127
        %v454 = vpop.permute.xlu0 %453
        %vm457 = vcmask 121856
        %v458 = vsel %vm457, %v452, 0.0
        %v459 = vsel %vm457, %v454, 0.0
        %v460 = vadd.f32 %v458, %v459
        %461 = vadd.xlane.f32.xlu0 %v460
        %v462 = vpop.xlane.xlu0 %461
        %v463 = vrot.slane %v462, 4
        %v464 = vadd.f32 %v462, %v463
        %v465 = vrot.slane %v464, 2
        %v466 = vadd.f32 %v464, %v465
        %v467 = vrot.slane %v466, 1
        %v468 = vadd.f32 %v466, %v467
        %s469 = vtos %v468
        %s470 = smul.f32 %s469, 0.0010416667
        %s471 = sadd.f32 %s448, %s470
        %s472 = sld [smem:[#allocation2]]
        %s473 = smul.f32 %s472, %s426
        %s474 = sld [smem:[#allocation2 + $0x1]]
        %s475 = smul.f32 %s474, %s471
        %s476 = sadd.f32 %s473, %s475
        %s477 = smul.u32 %s22, 128
        %s478 = scalar_lea.smem [#allocation9], %s477
        %479 = sst [smem:[%s478]] %s476
        // Predicated region
        $region45: #{tpu_custom_call.1} parent=31 // pred_check
          %p480 = pneg %p108
        $region46: #{tpu_custom_call.1} parent=31 // pred_check_branch
          %482 = sbr.rel (%p480) target = $region48
        $region47: #{tpu_custom_call.1} parent=31 // pred_region
          %s484 = ssub.s32 32, 32
          %485 = vsyncadd [#allocation5], %s484
          %s487 = sshll.u32 %s3, 4
          %s488 = int_to_ptr.vmem [resolvable:$true] %s487
          %490 = dma.smem_to_vmem [#allocation9], 32, %s488, [#allocation5]
        $region48: #{tpu_custom_call.1} parent=31 // pred_fallthru
          _
        // Predicated region
        $region49: #{tpu_custom_call.1} parent=31 // pred_check
          %p491 = pneg %p108
        $region50: #{tpu_custom_call.1} parent=31 // pred_check_branch
          %493 = sbr.rel (%p491) target = $region52
        $region51: #{tpu_custom_call.1} parent=31 // pred_region
          %494 = dma.done [#allocation5], 32
        $region52: #{tpu_custom_call.1} parent=31 // pred_fallthru
          _
        %495 = sfence
      $region32: #{tpu_custom_call.1} parent=5 // pred_fallthru
        _
      %p496 = scmp.le.s32.totalorder 2, %s17
      // Predicated region
      $region53: #{tpu_custom_call.1} parent=5 // pred_check
        %p497 = pneg %p496
      $region54: #{tpu_custom_call.1} parent=5 // pred_check_branch
        %499 = sbr.rel (%p497) target = $region56
      $region55: #{tpu_custom_call.1} parent=5 // pred_region
        %s500 = ssub.s32 %s17, 2
      $region56: #{tpu_custom_call.1} parent=5 // pred_fallthru
        _
    $region6: #{tpu_custom_call.1} parent=1 // loop_footer
      %s21 = sadd.s32 1, %s17
    $region7: #{tpu_custom_call.1} parent=1 // loop_footer_branch
      %16 = sbr.rel target = $region3
    $region8: #{tpu_custom_call.1} parent=1 // loop_exit
      _
    %501 = vsyncpa [#allocation3], 1
    %s502 = scalar_lea.sflag [#allocation3], 1
    %503 = vsyncpa %s502, 1
    %504 = vsyncpa [#allocation8], 1
    %s505 = scalar_lea.sflag [#allocation8], 1
    %506 = vsyncpa %s505, 1
    %507 = vsyncpa [#allocation4], 1
    %s508 = scalar_lea.sflag [#allocation4], 1
    %509 = vsyncpa %s508, 1
    %510 = vsyncpa [#allocation5], 1
    %s511 = scalar_lea.sflag [#allocation5], 1
    %512 = vsyncpa %s511, 1

</llo_original>
